<compile_context>
chip_gen: v6e
topology: v6e:2x2x1
jax: 0.10.0
libtpu: 0.0.40
codegen_flags: <defaults>
</compile_context>

<pallas_src>
import functools

import jax
import jax.numpy as jnp
from jax.experimental import pallas as pl
from jax.experimental.pallas import tpu as pltpu

_NEG_BIG = -1.0e30  # finite "minus infinity" (avoids inf-inf in the rescale)


def _ce_online_kernel(x_ref, t_ref, nll_ref, m_sc, l_sc, p_sc, *,
                      tile_b, tile_c, batch, classes, mask_lanes):
    """One (batch-tile, class-tile) step of online-LSE cross entropy.

    x_ref   : [tile_b, tile_c]  logits block (f32 or bf16; upcast in-kernel)
    t_ref   : [tile_b, 1]       int32 targets (resident across class tiles)
    nll_ref : [tile_b, 1]       f32 per-row -log_softmax(x)[t]; written at the
                                last class step only
    m_sc/l_sc/p_sc : [tile_b,1] f32 running max / sum(exp) / picked logit
    """
    i = pl.program_id(0)        # batch-tile index  ("parallel")
    j = pl.program_id(1)        # class-tile index  ("arbitrary", innermost)

    @pl.when(j == 0)
    def _init():
        m_sc[...] = jnp.full_like(m_sc, _NEG_BIG)
        l_sc[...] = jnp.zeros_like(l_sc)
        p_sc[...] = jnp.zeros_like(p_sc)

    x = x_ref[...].astype(jnp.float32)                          # [TB, TC]
    t = t_ref[...]                                              # [TB, 1]

    # Global class index of every lane in this block.
    # TODO(synk): hoist this grid-invariant iota into VMEM scratch once a
    # per-core "first iteration" predicate exists (i==0 is wrong under
    # megacore sharding of the parallel batch axis).
    col = jax.lax.broadcasted_iota(jnp.int32, x.shape, 1) + j * tile_c
    if mask_lanes:  # static flag: only when the last class block is partial
        x = jnp.where(col < classes, x, _NEG_BIG)

    # Online (flash-style) log-sum-exp update.  exp() runs on the EUP slot.
    m_prev = m_sc[...]
    m_new = jnp.maximum(m_prev, jnp.max(x, axis=1, keepdims=True))
    l_sc[...] = (l_sc[...] * jnp.exp(m_prev - m_new)
                 + jnp.sum(jnp.exp(x - m_new), axis=1, keepdims=True))
    m_sc[...] = m_new

    # Picked (target) logit, accumulated in absolute form; at most one class
    # block per row contributes (masked lanes never match since t < classes).
    p_sc[...] += jnp.sum(jnp.where(col == t, x, 0.0), axis=1, keepdims=True)

    @pl.when(j == pl.num_programs(1) - 1)
    def _finalize():
        nll = m_sc[...] + jnp.log(l_sc[...]) - p_sc[...]        # lse - picked
        # Zero rows of a (possibly partial) tail batch tile via select, so
        # NaN/Inf from garbage rows can never leak into the result.
        row = jax.lax.broadcasted_iota(jnp.int32, (tile_b, 1), 0) + i * tile_b
        nll_ref[...] = jnp.where(row < batch, nll, 0.0)


def _vmem_budgets():
    """(input-block byte budget, vmem_limit_bytes), gated on VMEM capacity."""
    vmem_cap = 128 * 1024 * 1024
    try:
        info = pltpu.get_tpu_info()
        vmem_cap = int(getattr(info, "vmem_capacity_bytes", vmem_cap))
    except Exception:
        pass
    if vmem_cap <= 64 * 1024 * 1024:               # v7x: 64 MiB per TensorCore
        return 40 * 1024 * 1024, 48 * 1024 * 1024
    return 80 * 1024 * 1024, 96 * 1024 * 1024      # v5e / v6e: 128 MiB physical


def _round_down(v, align):
    return max(align, (v // align) * align)


def _choose_tiles(B, C, itemsize, block_budget_bytes):
    # Per streamed element: 2 pipeline buffers of the input block plus roughly
    # 4 f32 in-kernel temporaries (upcast, shifted, exp, iota/compare masks).
    per_elem = 2 * itemsize + 16
    elem_budget = max(8 * 128, block_budget_bytes // per_elem)
    row_align = 8 if itemsize >= 4 else 16         # keep bf16 packed rows whole

    if 8 * C <= elem_budget:
        tile_c = C                                  # full-row blocks, no C grid
        tb = max(8, elem_budget // C)
        tile_b = B if tb >= B else _round_down(tb, row_align)
    else:
        # Large vocab: block C (multiple of 128), keep a healthy row count.
        tile_b = B if B <= 256 else 256
        tile_c = _round_down(elem_budget // max(tile_b, 1), 128)
    return tile_b, tile_c


def log_softmax_wrapper_loss(outputs, targets, *, tile_b=None, tile_c=None):
    """outputs: [B, 1, C] float (f32/bf16); targets: [B, 1] int -> scalar f32.

    Equivalent to speechbrain LogSoftmaxWrapper(nn.Identity())(outputs, targets).
    Denominator one_hot.sum() == B is baked in at trace time (one valid class
    per row, matching the module's semantics).
    """
    B = outputs.shape[0]
    C = outputs.shape[-1]
    x = outputs.reshape(B, C)                       # squeeze(1); keep dtype
    t = targets.reshape(B, 1).astype(jnp.int32)

    block_budget, vmem_limit = _vmem_budgets()
    auto_b, auto_c = _choose_tiles(B, C, x.dtype.itemsize, block_budget)

    if tile_b is None:
        tile_b = auto_b
    else:
        tile_b = min(int(tile_b), B)
        if tile_b < B:
            tile_b = _round_down(tile_b, 8)
    if tile_c is None:
        tile_c = auto_c
    else:
        tile_c = min(int(tile_c), C)
        if tile_c < C:
            tile_c = _round_down(tile_c, 128)

    num_b = pl.cdiv(B, tile_b)
    num_c = pl.cdiv(C, tile_c)
    mask_lanes = (tile_c < C) and (C % tile_c != 0)

    kernel = functools.partial(
        _ce_online_kernel, tile_b=tile_b, tile_c=tile_c,
        batch=B, classes=C, mask_lanes=mask_lanes)

    nll = pl.pallas_call(
        kernel,
        out_shape=jax.ShapeDtypeStruct((B, 1), jnp.float32),
        grid=(num_b, num_c),
        in_specs=[
            pl.BlockSpec((tile_b, tile_c), lambda i, j: (i, j)),   # logits stream
            pl.BlockSpec((tile_b, 1), lambda i, j: (i, 0)),        # targets (resident over j)
        ],
        out_specs=pl.BlockSpec((tile_b, 1), lambda i, j: (i, 0)),  # per-row NLL
        scratch_shapes=[pltpu.VMEM((tile_b, 1), jnp.float32)] * 3,
        compiler_params=pltpu.CompilerParams(
            dimension_semantics=("parallel", "arbitrary"),
            vmem_limit_bytes=vmem_limit,
        ),
        cost_estimate=pl.CostEstimate(
            flops=6 * B * C,
            transcendentals=B * C,
            bytes_accessed=B * C * x.dtype.itemsize + 8 * B,
        ),
    )(x, t)

    # one_hot.sum() == B  ->  mean over the batch.
    return jnp.sum(nll) * (1.0 / B)


def _reference_loss(outputs, targets):
    B, _, C = outputs.shape
    x = outputs.reshape(B, C).astype(jnp.float32)
    t = targets.reshape(B).astype(jnp.int32)
    logp = jax.nn.log_softmax(x, axis=1)
    nll = -jnp.take_along_axis(logp, t[:, None], axis=1).sum()
    return nll / B


if __name__ == "__main__":
    key = jax.random.PRNGKey(0)
    k1, k2 = jax.random.split(key)

    B, C = 20, 300
    outputs = jax.random.normal(k1, (B, 1, C), dtype=jnp.float32)
    targets = jax.random.randint(k2, (B, 1), 0, C, dtype=jnp.int32)
    ref = _reference_loss(outputs, targets)

    # 1) Default (auto-tiled, single class tile) path.
    loss = jax.block_until_ready(log_softmax_wrapper_loss(outputs, targets))
    assert jnp.allclose(loss, ref, atol=1e-5, rtol=1e-5), (loss, ref)

    # 2) Forced multi-tile path: 8-row batch tiles, 128-lane class tiles
    #    (exercises the online LSE with partial tail tiles on both axes).
    loss_t = jax.block_until_ready(
        log_softmax_wrapper_loss(outputs, targets, tile_b=8, tile_c=128))
    assert jnp.allclose(loss_t, ref, atol=1e-5, rtol=1e-5), (loss_t, ref)

    # 3) bf16 logits stream half the HBM bytes; f32 math stays in-kernel.
    outputs_bf16 = outputs.astype(jnp.bfloat16)
    loss_bf = jax.block_until_ready(
        log_softmax_wrapper_loss(outputs_bf16, targets))
    ref_bf = _reference_loss(outputs_bf16, targets)
    assert jnp.allclose(loss_bf, ref_bf, atol=2e-2, rtol=2e-2), (loss_bf, ref_bf)

    # 4) The module docstring example: loss must lie in [0, 1).
    ex_out = jnp.array([[1., -1.], [-1., 1.], [0.9, 0.1], [0.1, 0.9]],
                       dtype=jnp.float32)[:, None, :]
    ex_tgt = jnp.array([[0], [1], [0], [1]], dtype=jnp.int32)
    ex_loss = jax.block_until_ready(log_softmax_wrapper_loss(ex_out, ex_tgt))
    ex_ref = _reference_loss(ex_out, ex_tgt)
    assert jnp.allclose(ex_loss, ex_ref, atol=1e-6, rtol=1e-6), (ex_loss, ex_ref)
    assert 0.0 <= float(ex_loss) < 1.0, ex_loss

    print("KERNEL_OK")
</pallas_src>

<mosaic_0001>
module attributes {stable_mosaic.version = 11 : i64} {
  func.func @_ce_online_kernel(%arg0: i32, %arg1: i32, %arg2: memref<20x300xf32, #tpu.memory_space<vmem>>, %arg3: memref<20x1xi32, #tpu.memory_space<vmem>>, %arg4: memref<20x1xf32, #tpu.memory_space<vmem>>, %arg5: memref<20x1xf32, #tpu.memory_space<vmem>>, %arg6: memref<20x1xf32, #tpu.memory_space<vmem>>, %arg7: memref<20x1xf32, #tpu.memory_space<vmem>>) attributes {dimension_semantics = [#tpu.dimension_semantics<parallel>, #tpu.dimension_semantics<arbitrary>], iteration_bounds = array<i64: 1, 1>, scalar_prefetch = 0 : i64, scratch_operands = 3 : i64, tpu.core_type = #tpu.core_type<tc>, window_params = [{transform_indices = @transform_0, window_bounds = array<i64: 20, 300>}, {transform_indices = @transform_1, window_bounds = array<i64: 20, 1>}, {transform_indices = @transform_2, window_bounds = array<i64: 20, 1>}]} {
    %c0_i32 = arith.constant 0 : i32
    %0 = arith.cmpi eq, %arg1, %c0_i32 : i32
    %1 = arith.extui %0 : i1 to i32
    %c0_i32_0 = arith.constant 0 : i32
    %2 = arith.cmpi ne, %1, %c0_i32_0 : i32
    scf.if %2 {
      %cst_21 = arith.constant -1.000000e+30 : f32
      %37 = vector.broadcast %cst_21 : f32 to vector<20x1xf32>
      %c0_22 = arith.constant 0 : index
      %c0_23 = arith.constant 0 : index
      %38 = vector.load %arg5[%c0_22, %c0_23] : memref<20x1xf32, #tpu.memory_space<vmem>>, vector<20x1xf32>
      tpu.vector_store %arg5[%c0_22, %c0_23], %37 {strides = array<i32>} : memref<20x1xf32, #tpu.memory_space<vmem>>, vector<20x1xf32>,
      %cst_24 = arith.constant 0.000000e+00 : f32
      %39 = vector.broadcast %cst_24 : f32 to vector<20x1xf32>
      %c0_25 = arith.constant 0 : index
      %c0_26 = arith.constant 0 : index
      %40 = vector.load %arg6[%c0_25, %c0_26] : memref<20x1xf32, #tpu.memory_space<vmem>>, vector<20x1xf32>
      tpu.vector_store %arg6[%c0_25, %c0_26], %39 {strides = array<i32>} : memref<20x1xf32, #tpu.memory_space<vmem>>, vector<20x1xf32>,
      %cst_27 = arith.constant 0.000000e+00 : f32
      %41 = vector.broadcast %cst_27 : f32 to vector<20x1xf32>
      %c0_28 = arith.constant 0 : index
      %c0_29 = arith.constant 0 : index
      %42 = vector.load %arg7[%c0_28, %c0_29] : memref<20x1xf32, #tpu.memory_space<vmem>>, vector<20x1xf32>
      tpu.vector_store %arg7[%c0_28, %c0_29], %41 {strides = array<i32>} : memref<20x1xf32, #tpu.memory_space<vmem>>, vector<20x1xf32>,
    } else {
    }
    %c0 = arith.constant 0 : index
    %c0_1 = arith.constant 0 : index
    %3 = vector.load %arg2[%c0, %c0_1] : memref<20x300xf32, #tpu.memory_space<vmem>>, vector<20x300xf32>
    %c0_2 = arith.constant 0 : index
    %c0_3 = arith.constant 0 : index
    %4 = vector.load %arg3[%c0_2, %c0_3] : memref<20x1xi32, #tpu.memory_space<vmem>>, vector<20x1xi32>
    %5 = tpu.iota {dimensions = array<i32: 1>} : vector<20x300xi32>
    %c300_i32 = arith.constant 300 : i32
    %6 = arith.muli %arg1, %c300_i32 : i32
    %7 = vector.broadcast %6 : i32 to vector<20x300xi32>
    %8 = arith.addi %5, %7 : vector<20x300xi32>
    %c0_4 = arith.constant 0 : index
    %c0_5 = arith.constant 0 : index
    %9 = vector.load %arg5[%c0_4, %c0_5] : memref<20x1xf32, #tpu.memory_space<vmem>>, vector<20x1xf32>
    %cst = arith.constant dense<0xFF800000> : vector<20xf32>
    %10 = vector.multi_reduction <maximumf>, %3, %cst [1] : vector<20x300xf32> to vector<20xf32>
    %11 = vector.shape_cast %10 : vector<20xf32> to vector<20x1xf32>
    %12 = arith.maximumf %9, %11 : vector<20x1xf32>
    %c0_6 = arith.constant 0 : index
    %c0_7 = arith.constant 0 : index
    %13 = vector.load %arg6[%c0_6, %c0_7] : memref<20x1xf32, #tpu.memory_space<vmem>>, vector<20x1xf32>
    %14 = arith.subf %9, %12 : vector<20x1xf32>
    %15 = math.exp %14 : vector<20x1xf32>
    %16 = arith.mulf %13, %15 : vector<20x1xf32>
    %17 = vector.broadcast %12 : vector<20x1xf32> to vector<20x300xf32>
    %18 = arith.subf %3, %17 : vector<20x300xf32>
    %19 = math.exp %18 : vector<20x300xf32>
    %cst_8 = arith.constant dense<0.000000e+00> : vector<20xf32>
    %20 = vector.multi_reduction <add>, %19, %cst_8 [1] : vector<20x300xf32> to vector<20xf32>
    %21 = vector.shape_cast %20 : vector<20xf32> to vector<20x1xf32>
    %22 = arith.addf %16, %21 : vector<20x1xf32>
    %c0_9 = arith.constant 0 : index
    %c0_10 = arith.constant 0 : index
    %23 = vector.load %arg6[%c0_9, %c0_10] : memref<20x1xf32, #tpu.memory_space<vmem>>, vector<20x1xf32>
    tpu.vector_store %arg6[%c0_9, %c0_10], %22 {strides = array<i32>} : memref<20x1xf32, #tpu.memory_space<vmem>>, vector<20x1xf32>,
    %c0_11 = arith.constant 0 : index
    %c0_12 = arith.constant 0 : index
    %24 = vector.load %arg5[%c0_11, %c0_12] : memref<20x1xf32, #tpu.memory_space<vmem>>, vector<20x1xf32>
    tpu.vector_store %arg5[%c0_11, %c0_12], %12 {strides = array<i32>} : memref<20x1xf32, #tpu.memory_space<vmem>>, vector<20x1xf32>,
    %c0_13 = arith.constant 0 : index
    %c0_14 = arith.constant 0 : index
    %25 = vector.load %arg7[%c0_13, %c0_14] : memref<20x1xf32, #tpu.memory_space<vmem>>, vector<20x1xf32>
    %26 = vector.broadcast %4 : vector<20x1xi32> to vector<20x300xi32>
    %27 = arith.cmpi eq, %8, %26 : vector<20x300xi32>
    %cst_15 = arith.constant 0.000000e+00 : f32
    %28 = vector.broadcast %cst_15 : f32 to vector<20x300xf32>
    %29 = arith.select %27, %3, %28 : vector<20x300xi1>, vector<20x300xf32>
    %cst_16 = arith.constant dense<0.000000e+00> : vector<20xf32>
    %30 = vector.multi_reduction <add>, %29, %cst_16 [1] : vector<20x300xf32> to vector<20xf32>
    %31 = vector.shape_cast %30 : vector<20xf32> to vector<20x1xf32>
    %32 = arith.addf %25, %31 : vector<20x1xf32>
    %c0_17 = arith.constant 0 : index
    %c0_18 = arith.constant 0 : index
    %33 = vector.load %arg7[%c0_17, %c0_18] : memref<20x1xf32, #tpu.memory_space<vmem>>, vector<20x1xf32>
    tpu.vector_store %arg7[%c0_17, %c0_18], %32 {strides = array<i32>} : memref<20x1xf32, #tpu.memory_space<vmem>>, vector<20x1xf32>,
    %c0_i32_19 = arith.constant 0 : i32
    %34 = arith.cmpi eq, %arg1, %c0_i32_19 : i32
    %35 = arith.extui %34 : i1 to i32
    %c0_i32_20 = arith.constant 0 : i32
    %36 = arith.cmpi ne, %35, %c0_i32_20 : i32
    scf.if %36 {
      %c0_21 = arith.constant 0 : index
      %c0_22 = arith.constant 0 : index
      %37 = vector.load %arg5[%c0_21, %c0_22] : memref<20x1xf32, #tpu.memory_space<vmem>>, vector<20x1xf32>
      %c0_23 = arith.constant 0 : index
      %c0_24 = arith.constant 0 : index
      %38 = vector.load %arg6[%c0_23, %c0_24] : memref<20x1xf32, #tpu.memory_space<vmem>>, vector<20x1xf32>
      %39 = math.log %38 : vector<20x1xf32>
      %40 = arith.addf %37, %39 : vector<20x1xf32>
      %c0_25 = arith.constant 0 : index
      %c0_26 = arith.constant 0 : index
      %41 = vector.load %arg7[%c0_25, %c0_26] : memref<20x1xf32, #tpu.memory_space<vmem>>, vector<20x1xf32>
      %42 = arith.subf %40, %41 : vector<20x1xf32>
      %43 = tpu.iota {dimensions = array<i32: 0>} : vector<20x1xi32>
      %c20_i32 = arith.constant 20 : i32
      %44 = arith.muli %arg0, %c20_i32 : i32
      %45 = vector.broadcast %44 : i32 to vector<20x1xi32>
      %46 = arith.addi %43, %45 : vector<20x1xi32>
      %c20_i32_27 = arith.constant 20 : i32
      %47 = vector.broadcast %c20_i32_27 : i32 to vector<20x1xi32>
      %48 = arith.cmpi slt, %46, %47 : vector<20x1xi32>
      %cst_28 = arith.constant 0.000000e+00 : f32
      %49 = vector.broadcast %cst_28 : f32 to vector<20x1xf32>
      %50 = arith.select %48, %42, %49 : vector<20x1xi1>, vector<20x1xf32>
      %c0_29 = arith.constant 0 : index
      %c0_30 = arith.constant 0 : index
      %51 = vector.load %arg4[%c0_29, %c0_30] : memref<20x1xf32, #tpu.memory_space<vmem>>, vector<20x1xf32>
      tpu.vector_store %arg4[%c0_29, %c0_30], %50 {strides = array<i32>} : memref<20x1xf32, #tpu.memory_space<vmem>>, vector<20x1xf32>,
    } else {
    }
    return
  }
  func.func @transform_0(%arg0: i32, %arg1: i32) -> (i32, i32) {
    %c0_i32 = arith.constant 0 : i32
    return %arg0, %arg1 : i32, i32
  }
  func.func @transform_1(%arg0: i32, %arg1: i32) -> (i32, i32) {
    %c0_i32 = arith.constant 0 : i32
    %c0_i32_0 = arith.constant 0 : i32
    return %arg0, %c0_i32 : i32, i32
  }
  func.func @transform_2(%arg0: i32, %arg1: i32) -> (i32, i32) {
    %c0_i32 = arith.constant 0 : i32
    %c0_i32_0 = arith.constant 0 : i32
    return %arg0, %c0_i32 : i32, i32
  }
}

</mosaic_0001>

<llo_original>
// kernel: tpu_custom_call.1
$region0: #{tpu_custom_call.1}
  #allocation0 [shape = 'u32[]', space=smem, size = 0x4, offset = 0x4, fixed_abs, tag = 'smem constant byte address 0x4 - core index']
  #allocation1 [shape = 'u32[144,128]{1,0:T(1,128)}', space=vmem, size = 0x12000, scoped, tag = 'internal scratch']
  #allocation2 [shape = 'f32[20,1]{1,0:T(8,128)}', space=vmem, size = 0x3000, scoped, tag = 'scratch operand']
  #allocation3 [shape = 'f32[20,1]{1,0:T(8,128)}', space=vmem, size = 0x3000, scoped, tag = 'scratch operand']
  #allocation4 [shape = 'f32[20,1]{1,0:T(8,128)}', space=vmem, size = 0x3000, scoped, tag = 'scratch operand']
  %s0 = inlined_call_operand.hbm [shape: f32[20,300], index: 0, kind: input, shape index: {}]
  %s1 = inlined_call_operand.vmem [shape: s32[20,1], index: 1, kind: input, shape index: {}]
  %s2 = inlined_call_operand.vmem [shape: f32[20,1], index: 2, kind: output, shape index: {}]
  %s3 = sld [smem:[#allocation0]]
  $region30: #{tpu_custom_call.1} parent=0
    _
  %s5 = ssub.s32 1, %s3
  %s6 = scalar_select 0, %s5, %s3
  $region1: #{tpu_custom_call.1} parent=0
    #allocation5 [shape = 'u8[36864]{0}', space=vmem, size = 0x9000, scoped, tag = 'input window, operand 0, single buffered']
    #allocation6 [shape = 's32[1]{0}', space=sflag, size = 0x4, scoped, tag = 'scoped memory for tpu_custom_call.1']
    %7 = vsyncpa [#allocation6], 0
    // Predicated region
    $region2: #{tpu_custom_call.1} parent=1 // pred_check
      _
    $region3: #{tpu_custom_call.1} parent=1 // pred_check_branch
      %9 = sbr.rel (0) target = $region5
    $region4: #{tpu_custom_call.1} parent=1 // pred_region
      %s11 = ssub.s32 1152, 1152
      %12 = vsyncadd [#allocation6], %s11
      %s13 = sshll.u32 [#allocation5], 4
      %s14 = int_to_ptr.vmem [resolvable:$true] %s13
      %19 = dma.hbm_to_vmem [thread:$0]  %s0, 1152, %s14, [#allocation6], 384, 384, 24
    $region5: #{tpu_custom_call.1} parent=1 // pred_fallthru
      _
    // Predicated region
    $region6: #{tpu_custom_call.1} parent=1 // pred_check
      _
    $region7: #{tpu_custom_call.1} parent=1 // pred_check_branch
      %21 = sbr.rel (0) target = $region9
    $region8: #{tpu_custom_call.1} parent=1 // pred_region
      _
    $region9: #{tpu_custom_call.1} parent=1 // pred_fallthru
      _
    // Predicated region
    $region10: #{tpu_custom_call.1} parent=1 // pred_check
      _
    $region11: #{tpu_custom_call.1} parent=1 // pred_check_branch
      %23 = sbr.rel (0) target = $region13
    $region12: #{tpu_custom_call.1} parent=1 // pred_region
      %24 = dma.done [#allocation6], 1152
    $region13: #{tpu_custom_call.1} parent=1 // pred_fallthru
      _
    %p25 = scmp.eq.s32.totalorder 0, 0
    // Predicated region
    $region14: #{tpu_custom_call.1} parent=1 // pred_check
      %p26 = pneg %p25
    $region15: #{tpu_custom_call.1} parent=1 // pred_check_branch
      %28 = sbr.rel (%p26) target = $region17
    $region16: #{tpu_custom_call.1} parent=1 // pred_region
      %vm29 = vcmask 7168
      %30 = vst.msk [vmem:[#allocation2] sm:$0xff] %vm29, -1e+30
      %31 = vst.msk [vmem:[#allocation2 + $0x8] sm:$0xff] %vm29, -1e+30
      %vm32 = vcmask 3072
      %33 = vst.msk [vmem:[#allocation2 + $0x10] sm:$0xf] %vm32, -1e+30
      %34 = vst.msk [vmem:[#allocation3] sm:$0xff] %vm29, 0.0
      %35 = vst.msk [vmem:[#allocation3 + $0x8] sm:$0xff] %vm29, 0.0
      %36 = vst.msk [vmem:[#allocation3 + $0x10] sm:$0xf] %vm32, 0.0
      %37 = vst.msk [vmem:[#allocation4] sm:$0xff] %vm29, 0.0
      %38 = vst.msk [vmem:[#allocation4 + $0x8] sm:$0xff] %vm29, 0.0
      %39 = vst.msk [vmem:[#allocation4 + $0x10] sm:$0xf] %vm32, 0.0
    $region17: #{tpu_custom_call.1} parent=1 // pred_fallthru
      _
    %v40 = vld [vmem:[#allocation5] sm:$0xff]
    %v41 = vld [vmem:[#allocation5 + $0x8] sm:$0xff]
    %v42 = vld [vmem:[#allocation5 + $0x10] sm:$0xff]
    %v43 = vld [vmem:[#allocation5 + $0x18] sm:$0xff]
    %v44 = vld [vmem:[#allocation5 + $0x20] sm:$0xff]
    %v45 = vld [vmem:[#allocation5 + $0x28] sm:$0xff]
    %v46 = vld [vmem:[#allocation5 + $0x30] sm:$0xf]
    %v47 = vld [vmem:[#allocation5 + $0x38] sm:$0xf]
    %v48 = vld [vmem:[#allocation5 + $0x40] sm:$0xf]
    %v49 = vld [vmem:[%s1] sm:$0xff]
    %v50 = vld [vmem:[%s1 + $0x8] sm:$0xff]
    %v51 = vld [vmem:[%s1 + $0x10] sm:$0xf]
    %v52 = vlaneseq
    %v53 = vand.u32 %v52, 127
    %v54 = vadd.s32 %v53, 128
    %v55 = vadd.s32 %v53, 256
    %s56 = smul.u32 0, 300
    %v57 = vstv %s56
    %v58 = vadd.s32 %v53, %v57
    %v59 = vadd.s32 %v54, %v57
    %v60 = vadd.s32 %v55, %v57
    %v61 = vld [vmem:[#allocation2] sm:$0xff]
    %v62 = vld [vmem:[#allocation2 + $0x8] sm:$0xff]
    %v63 = vld [vmem:[#allocation2 + $0x10] sm:$0xf]
    %vm64 = vcmask 359424
    %v65 = vsel %vm64, %v42, -inf
    %v66 = vmax.f32 %v40, %v65
    %v67 = vmax.f32 %v66, %v41
    %68 = vmax.xlane.f32.xlu0 %v67
    %v69 = vpop.xlane.xlu0 %68
    %v70 = vsel %vm64, %v45, -inf
    %v71 = vmax.f32 %v43, %v70
    %v72 = vmax.f32 %v71, %v44
    %73 = vmax.xlane.f32.xlu0 %v72
    %v74 = vpop.xlane.xlu0 %73
    %vm75 = vcmask 1043456
    %v76 = vsel %vm75, %v46, -inf
    %v77 = vsel %vm75, %v47, -inf
    %vm78 = vcmask 355328
    %v79 = vsel %vm78, %v48, -inf
    %v80 = vmax.f32 %v76, %v79
    %v81 = vmax.f32 %v80, %v77
    %82 = vmax.xlane.f32.xlu0 %v81
    %v83 = vpop.xlane.xlu0 %82
    %v84 = vmax.f32 %v61, %v69
    %v85 = vmax.f32 %v62, %v74
    %v86 = vmax.f32 %v63, %v83
    %v87 = vld [vmem:[#allocation3] sm:$0xff]
    %v88 = vld [vmem:[#allocation3 + $0x8] sm:$0xff]
    %v89 = vld [vmem:[#allocation3 + $0x10] sm:$0xf]
    %v90 = vsub.f32 %v61, %v84
    %v91 = vsub.f32 %v62, %v85
    %v92 = vsub.f32 %v63, %v86
    %v93 = vmul.f32 %v90, 1.442695
    %v94 = vpow.pop %v93
    %v95 = vmul.f32 %v91, 1.442695
    %v96 = vpow.pop %v95
    %v97 = vmul.f32 %v92, 1.442695
    %v98 = vpow.pop %v97
    %v99 = vmul.f32 %v87, %v94
    %v100 = vmul.f32 %v88, %v96
    %v101 = vmul.f32 %v89, %v98
    %103 = vset.pattern.permute.xlu0 0
    %104 = vperm.xlu0 %103, %v84
    %v105 = vpop.permute.xlu0 %104
    %108 = vset.pattern.permute.xlu0 0
    %109 = vperm.xlu0 %108, %v85
    %v110 = vpop.permute.xlu0 %109
    %113 = vset.pattern.permute.xlu0 0
    %114 = vperm.xlu0 %113, %v86
    %v115 = vpop.permute.xlu0 %114
    %v117 = vsub.f32 %v40, %v105
    %v118 = vsub.f32 %v41, %v105
    %v119 = vsub.f32 %v42, %v105
    %v120 = vsub.f32 %v43, %v110
    %v121 = vsub.f32 %v44, %v110
    %v122 = vsub.f32 %v45, %v110
    %v123 = vsub.f32 %v46, %v115
    %v124 = vsub.f32 %v47, %v115
    %v125 = vsub.f32 %v48, %v115
    %v126 = vmul.f32 %v117, 1.442695
    %v127 = vpow.pop %v126
    %v128 = vmul.f32 %v118, 1.442695
    %v129 = vpow.pop %v128
    %v130 = vmul.f32 %v119, 1.442695
    %v131 = vpow.pop %v130
    %v132 = vmul.f32 %v120, 1.442695
    %v133 = vpow.pop %v132
    %v134 = vmul.f32 %v121, 1.442695
    %v135 = vpow.pop %v134
    %v136 = vmul.f32 %v122, 1.442695
    %v137 = vpow.pop %v136
    %v138 = vmul.f32 %v123, 1.442695
    %v139 = vpow.pop %v138
    %v140 = vmul.f32 %v124, 1.442695
    %v141 = vpow.pop %v140
    %v142 = vmul.f32 %v125, 1.442695
    %v143 = vpow.pop %v142
    %v144 = vadd.f32 %v127, %v129
    %v145 = vsel %vm64, %v131, 0.0
    %v146 = vadd.f32 %v144, %v145
    %147 = vadd.xlane.f32.xlu0 %v146
    %v148 = vpop.xlane.xlu0 %147
    %v149 = vadd.f32 %v133, %v135
    %v150 = vsel %vm64, %v137, 0.0
    %v151 = vadd.f32 %v149, %v150
    %152 = vadd.xlane.f32.xlu0 %v151
    %v153 = vpop.xlane.xlu0 %152
    %v154 = vsel %vm75, %v139, 0.0
    %v155 = vsel %vm75, %v141, 0.0
    %v156 = vadd.f32 %v154, %v155
    %v157 = vsel %vm78, %v143, 0.0
    %v158 = vadd.f32 %v156, %v157
    %159 = vadd.xlane.f32.xlu0 %v158
    %v160 = vpop.xlane.xlu0 %159
    %v161 = vadd.f32 %v99, %v148
    %v162 = vadd.f32 %v100, %v153
    %v163 = vadd.f32 %v101, %v160
    %vm164 = vcmask 7168
    %165 = vst.msk [vmem:[#allocation3] sm:$0xff] %vm164, %v161
    %166 = vst.msk [vmem:[#allocation3 + $0x8] sm:$0xff] %vm164, %v162
    %vm167 = vcmask 3072
    %168 = vst.msk [vmem:[#allocation3 + $0x10] sm:$0xf] %vm167, %v163
    %169 = vst.msk [vmem:[#allocation2] sm:$0xff] %vm164, %v84
    %170 = vst.msk [vmem:[#allocation2 + $0x8] sm:$0xff] %vm164, %v85
    %171 = vst.msk [vmem:[#allocation2 + $0x10] sm:$0xf] %vm167, %v86
    %v172 = vld [vmem:[#allocation4] sm:$0xff]
    %v173 = vld [vmem:[#allocation4 + $0x8] sm:$0xff]
    %v174 = vld [vmem:[#allocation4 + $0x10] sm:$0xf]
    %175 = vset.pattern.permute.xlu0 0
    %176 = vperm.xlu0 %175, %v49
    %v177 = vpop.permute.xlu0 %176
    %178 = vset.pattern.permute.xlu0 0
    %179 = vperm.xlu0 %178, %v50
    %v180 = vpop.permute.xlu0 %179
    %181 = vset.pattern.permute.xlu0 0
    %182 = vperm.xlu0 %181, %v51
    %v183 = vpop.permute.xlu0 %182
    %vm184 = vcmp.eq.s32.totalorder %v58, %v177
    %vm185 = vcmp.eq.s32.totalorder %v59, %v177
    %vm186 = vcmp.eq.s32.totalorder %v60, %v177
    %vm187 = vcmp.eq.s32.totalorder %v58, %v180
    %vm188 = vcmp.eq.s32.totalorder %v59, %v180
    %vm189 = vcmp.eq.s32.totalorder %v60, %v180
    %vm190 = vcmp.eq.s32.totalorder %v58, %v183
    %vm191 = vcmp.eq.s32.totalorder %v59, %v183
    %vm192 = vcmp.eq.s32.totalorder %v60, %v183
    %v193 = vsel %vm184, %v40, 0.0
    %v194 = vsel %vm185, %v41, 0.0
    %v195 = vsel %vm186, %v42, 0.0
    %v196 = vsel %vm187, %v43, 0.0
    %v197 = vsel %vm188, %v44, 0.0
    %v198 = vsel %vm189, %v45, 0.0
    %v199 = vsel %vm190, %v46, 0.0
    %v200 = vsel %vm191, %v47, 0.0
    %v201 = vsel %vm192, %v48, 0.0
    %v202 = vadd.f32 %v193, %v194
    %v203 = vsel %vm64, %v195, 0.0
    %v204 = vadd.f32 %v202, %v203
    %205 = vadd.xlane.f32.xlu0 %v204
    %v206 = vpop.xlane.xlu0 %205
    %v207 = vadd.f32 %v196, %v197
    %v208 = vsel %vm64, %v198, 0.0
    %v209 = vadd.f32 %v207, %v208
    %210 = vadd.xlane.f32.xlu0 %v209
    %v211 = vpop.xlane.xlu0 %210
    %v212 = vsel %vm75, %v199, 0.0
    %v213 = vsel %vm75, %v200, 0.0
    %v214 = vadd.f32 %v212, %v213
    %v215 = vsel %vm78, %v201, 0.0
    %v216 = vadd.f32 %v214, %v215
    %217 = vadd.xlane.f32.xlu0 %v216
    %v218 = vpop.xlane.xlu0 %217
    %v219 = vadd.f32 %v172, %v206
    %v220 = vadd.f32 %v173, %v211
    %v221 = vadd.f32 %v174, %v218
    %222 = vst.msk [vmem:[#allocation4] sm:$0xff] %vm164, %v219
    %223 = vst.msk [vmem:[#allocation4 + $0x8] sm:$0xff] %vm164, %v220
    %224 = vst.msk [vmem:[#allocation4 + $0x10] sm:$0xf] %vm167, %v221
    // Predicated region
    $region18: #{tpu_custom_call.1} parent=1 // pred_check
      %p225 = pneg %p25
    $region19: #{tpu_custom_call.1} parent=1 // pred_check_branch
      %227 = sbr.rel (%p225) target = $region21
    $region20: #{tpu_custom_call.1} parent=1 // pred_region
      %v228 = vld [vmem:[#allocation2] sm:$0xff]
      %v229 = vld [vmem:[#allocation2 + $0x8] sm:$0xff]
      %v230 = vld [vmem:[#allocation2 + $0x10] sm:$0xf]
      %v231 = vld [vmem:[#allocation3] sm:$0xff]
      %v232 = vld [vmem:[#allocation3 + $0x8] sm:$0xff]
      %v233 = vld [vmem:[#allocation3 + $0x10] sm:$0xf]
      %v234 = vlog2.pop %v231
      %v235 = vmul.f32 %v234, 0.6931472
      %v236 = vlog2.pop %v232
      %v237 = vmul.f32 %v236, 0.6931472
      %v238 = vlog2.pop %v233
      %v239 = vmul.f32 %v238, 0.6931472
      %v240 = vadd.f32 %v228, %v235
      %v241 = vadd.f32 %v229, %v237
      %v242 = vadd.f32 %v230, %v239
      %v243 = vld [vmem:[#allocation4] sm:$0xff]
      %v244 = vld [vmem:[#allocation4 + $0x8] sm:$0xff]
      %v245 = vld [vmem:[#allocation4 + $0x10] sm:$0xf]
      %v246 = vsub.f32 %v240, %v243
      %v247 = vsub.f32 %v241, %v244
      %v248 = vsub.f32 %v242, %v245
      %v249 = vlaneseq
      %v250 = vshrl.u32 %v249, 7
      %v251 = vadd.s32 %v250, 8
      %v252 = vadd.s32 %v250, 16
      %s253 = smul.u32 0, 20
      %v254 = vstv %s253
      %v255 = vadd.s32 %v250, %v254
      %v256 = vadd.s32 %v251, %v254
      %v257 = vadd.s32 %v252, %v254
      %vm258 = vcmp.lt.s32.totalorder %v255, 20
      %vm259 = vcmp.lt.s32.totalorder %v256, 20
      %vm260 = vcmp.lt.s32.totalorder %v257, 20
      %v261 = vsel %vm258, %v246, 0.0
      %v262 = vsel %vm259, %v247, 0.0
      %v263 = vsel %vm260, %v248, 0.0
      %264 = vst.msk [vmem:[%s2] sm:$0xff] %vm164, %v261
      %265 = vst.msk [vmem:[%s2 + $0x8] sm:$0xff] %vm164, %v262
      %266 = vst.msk [vmem:[%s2 + $0x10] sm:$0xf] %vm167, %v263
    $region21: #{tpu_custom_call.1} parent=1 // pred_fallthru
      _
    // Predicated region
    $region22: #{tpu_custom_call.1} parent=1 // pred_check
      _
    $region23: #{tpu_custom_call.1} parent=1 // pred_check_branch
      %268 = sbr.rel (0) target = $region25
    $region24: #{tpu_custom_call.1} parent=1 // pred_region
      _
    $region25: #{tpu_custom_call.1} parent=1 // pred_fallthru
      _
    // Predicated region
    $region26: #{tpu_custom_call.1} parent=1 // pred_check
      _
    $region27: #{tpu_custom_call.1} parent=1 // pred_check_branch
      %270 = sbr.rel (0) target = $region29
    $region28: #{tpu_custom_call.1} parent=1 // pred_region
      _
    $region29: #{tpu_custom_call.1} parent=1 // pred_fallthru
      _
    %271 = vsyncpa [#allocation6], 1

</llo_original>
